<compile_context>
chip_gen: v5e
topology: v5e:2x2
jax: 0.10.0
libtpu: 0.0.40
codegen_flags: <defaults>
</compile_context>

<pallas_src>
import functools

import jax
import jax.numpy as jnp
from jax.experimental import pallas as pl
from jax.experimental.pallas import tpu as pltpu

LANE = 128
# bf16 adj/m/h halves the dominant HBM stream (adj@m is ~64 flop/byte in f32,
# far below the compute-bound threshold); accumulation stays f32 via
# preferred_element_type.  Set to jnp.float32 for exact reference numerics.
ADJ_DTYPE = jnp.bfloat16
VMEM_LIMIT = 48 * 1024 * 1024      # > v5e(16)/v6e(32) defaults, < v7x 64 MiB physical
RESIDENT_LIMIT = 8 * 1024 * 1024   # per-array budget (incl. double buffer) for residence


def _round_up(v, m):
    return ((v + m - 1) // m) * m


def _pad2(w, rows, cols):
    r, c = w.shape
    return jnp.pad(w, ((0, rows - r), (0, cols - c)))


def _resident(arr):
    """Keep an operand fully resident in VMEM if 2x its bytes fit the budget."""
    return 2 * arr.size * arr.dtype.itemsize <= RESIDENT_LIMIT


def _pick_tiles(np_):
    """tk: largest of (512,256,128) dividing Np (HBM-roofline sweet spot).
    tm: same, but capped at Np//2 so the parallel row axis has >=2 tiles
    (v7x megacore sharding + row-tile pipelining)."""
    cands = [c for c in (512, 256, 128) if np_ % c == 0]
    assert cands, "Np must be padded to a multiple of 128"
    tk = cands[0]
    tm = next((c for c in cands if 2 * c <= np_), cands[-1])
    return tm, tk


# --------------------- projection kernel (no host-side concat) ---------------------
def _project_kernel(*refs, n_in, with_f):
    # refs = (x_0..x_{n-1}, w_0..w_{n-1}[, a2h], o_ref[, f1_ref, f2_ref])
    xs = refs[:n_in]
    ws = refs[n_in:2 * n_in]
    pos = 2 * n_in
    a2h_ref = refs[pos] if with_f else None
    if with_f:
        pos += 1
    o_ref = refs[pos]

    acc = jnp.dot(xs[0][...], ws[0][...], preferred_element_type=jnp.float32)
    for j in range(1, n_in):
        acc = acc + jnp.dot(xs[j][...], ws[j][...],
                            preferred_element_type=jnp.float32)
    o_ref[...] = acc.astype(o_ref.dtype)

    if with_f:
        # rank-1 "a" projections in the epilogue while acc is still in VMEM
        f1_ref, f2_ref = refs[pos + 1], refs[pos + 2]
        f1_ref[...] = jnp.sum(acc * a2h_ref[0:1, :], axis=1, keepdims=True)
        f2_ref[...] = jnp.sum(acc * a2h_ref[1:2, :], axis=1, keepdims=True)


def project_concat(xs, ws, tm, *, out_dtype=jnp.float32, a2h=None):
    """cat(xs, axis=1) @ vstack(ws) without materializing the concat.

    xs[j]: (Np, F_j); ws[j]: (F_j, Hpad) f32 (zero rows matching zero pad
    columns of xs[j]).  Returns (Np, Hpad) in `out_dtype` (lane-dense), and if
    a2h (2, Hpad) is given additionally f1 = h@a1, f2 = h@a2 as (Np, 1) f32.
    """
    Np = xs[0].shape[0]
    Hpad = ws[0].shape[1]
    with_f = a2h is not None

    in_specs = ([pl.BlockSpec((tm, xj.shape[1]), lambda i: (i, 0)) for xj in xs]
                + [pl.BlockSpec(wj.shape, lambda i: (0, 0)) for wj in ws])
    operands = list(xs) + list(ws)
    out_shapes = [jax.ShapeDtypeStruct((Np, Hpad), out_dtype)]
    out_specs = [pl.BlockSpec((tm, Hpad), lambda i: (i, 0))]
    if with_f:
        in_specs.append(pl.BlockSpec((2, Hpad), lambda i: (0, 0)))
        operands.append(a2h)
        out_shapes += [jax.ShapeDtypeStruct((Np, 1), jnp.float32)] * 2
        out_specs += [pl.BlockSpec((tm, 1), lambda i: (i, 0))] * 2

    return pl.pallas_call(
        functools.partial(_project_kernel, n_in=len(xs), with_f=with_f),
        out_shape=tuple(out_shapes) if with_f else out_shapes[0],
        grid_spec=pltpu.PrefetchScalarGridSpec(
            num_scalar_prefetch=0,
            grid=(Np // tm,),
            in_specs=in_specs,
            out_specs=tuple(out_specs) if with_f else out_specs[0]),
        compiler_params=pltpu.CompilerParams(
            dimension_semantics=("parallel",),
            vmem_limit_bytes=VMEM_LIMIT),
    )(*operands)


# --------------------- snowball aggregation: act(adj @ m + b) ---------------------
def _adj_agg_kernel(adj_ref, m_ref, b_ref, o_ref, *, activate, tk, m_resident):
    k = pl.program_id(1)

    @pl.when(k == 0)
    def _():
        o_ref[...] = jnp.zeros(o_ref.shape, jnp.float32)

    if m_resident:
        kstart = pl.multiple_of(k * tk, tk)
        m_blk = m_ref[pl.ds(kstart, tk), :]
    else:
        m_blk = m_ref[...]
    # accumulate directly into the resident f32 output block (no acc scratch)
    o_ref[...] += jnp.dot(adj_ref[...], m_blk, preferred_element_type=jnp.float32)

    @pl.when(k == pl.num_programs(1) - 1)
    def _():
        out = o_ref[...] + b_ref[...]
        if activate:
            # TODO(synk): activation_1 is a constructor arg in the reference;
            # tanh (the standard snowball choice) is assumed here.
            out = jnp.tanh(out)
        o_ref[...] = out


def adj_aggregate(adj, m, b_pad, *, activate, tm, tk):
    """act(adj @ m + b) on a (row-tile 'parallel', adj-col-tile 'arbitrary')
    grid, accumulating in the resident f32 output block."""
    Np = adj.shape[0]
    Hpad = m.shape[1]
    m_res = _resident(m)
    m_spec = (pl.BlockSpec((Np, Hpad), lambda i, k: (0, 0)) if m_res
              else pl.BlockSpec((tk, Hpad), lambda i, k: (k, 0)))
    return pl.pallas_call(
        functools.partial(_adj_agg_kernel, activate=activate, tk=tk,
                          m_resident=m_res),
        out_shape=jax.ShapeDtypeStruct((Np, Hpad), jnp.float32),
        grid_spec=pltpu.PrefetchScalarGridSpec(
            num_scalar_prefetch=0,
            grid=(Np // tm, Np // tk),
            in_specs=[pl.BlockSpec((tm, tk), lambda i, k: (i, k)),
                      m_spec,
                      pl.BlockSpec((1, Hpad), lambda i, k: (0, 0))],
            out_specs=pl.BlockSpec((tm, Hpad), lambda i, k: (i, 0))),
        compiler_params=pltpu.CompilerParams(
            dimension_semantics=("parallel", "arbitrary"),
            vmem_limit_bytes=VMEM_LIMIT),
    )(adj, m, b_pad)


# ------------- fused pass: snowball aggregation + multi-head GAT (one adj stream) -------------
def _fused_adj_kernel(adj_ref, m_ref, b_ref, h_ref, f1_ref, f2t_ref,
                      gcn_ref, att_ref, m_sc, l_sc,
                      *, activate, alpha, nheads, tk, m_resident, h_resident):
    k = pl.program_id(1)
    kstart = pl.multiple_of(k * tk, tk)

    @pl.when(k == 0)
    def _():
        gcn_ref[...] = jnp.zeros(gcn_ref.shape, jnp.float32)
        att_ref[...] = jnp.zeros(att_ref.shape, jnp.float32)
        m_sc[...] = jnp.full(m_sc.shape, -1e30, jnp.float32)
        l_sc[...] = jnp.zeros(l_sc.shape, jnp.float32)

    adj = adj_ref[...]                                   # one adj DMA per tile,
    mask = adj != 0                                      # shared by GCN + all heads

    # ---- snowball: adj @ m accumulated directly in the resident f32 output ----
    m_blk = m_ref[pl.ds(kstart, tk), :] if m_resident else m_ref[...]
    gcn_ref[...] += jnp.dot(adj, m_blk, preferred_element_type=jnp.float32)

    # ---- GAT heads: online masked softmax over adj column tiles ----
    for hd in range(nheads):                             # static unroll
        e = f1_ref[hd] + f2t_ref[hd]                     # (tm, tk) f32
        s = -jnp.maximum(e, alpha * e)                   # == -leaky_relu(e), alpha<1
        s = jnp.where(mask, s, -1e30)
        m_old = m_sc[hd]
        m_new = jnp.maximum(m_old, jnp.max(s, axis=1, keepdims=True))
        corr = jnp.exp(m_old - m_new)
        # the mask-where on p is load-bearing for fully-masked (e.g. padded) rows
        p = jnp.where(mask, jnp.exp(s - m_new), 0.0)
        l_sc[hd] = corr * l_sc[hd] + jnp.sum(p, axis=1, keepdims=True)
        if h_resident:
            h_blk = h_ref[hd, pl.ds(kstart, tk), :]
        else:
            h_blk = h_ref[hd]
        att_ref[hd] = corr * att_ref[hd] + jnp.dot(
            p.astype(h_blk.dtype), h_blk, preferred_element_type=jnp.float32)
        m_sc[hd] = m_new

    @pl.when(k == pl.num_programs(1) - 1)
    def _():
        out = gcn_ref[...] + b_ref[...]
        if activate:
            # TODO(synk): activation_1 assumed tanh (see adj_aggregate).
            out = jnp.tanh(out)
        gcn_ref[...] = out
        for hd in range(nheads):
            # guard isolated / padded rows (adj has self-loops in practice)
            hp = att_ref[hd] / jnp.maximum(l_sc[hd], 1e-30)
            att_ref[hd] = jnp.where(hp > 0, hp,
                                    jnp.exp(jnp.minimum(hp, 0.0)) - 1.0)  # elu


def fused_adj_pass(adj, m, b_pad, h, f1, f2t, *, activate, alpha, tm, tk):
    """One streaming pass over adj computing BOTH act(adj@m+b) and the
    multi-head masked-softmax GAT aggregation; the (tm,tk) adj tile is DMA'd
    once per grid step and shared."""
    Np = adj.shape[0]
    H1p = m.shape[1]
    NH, _, H2p = h.shape
    m_res = _resident(m)
    h_res = _resident(h)
    m_spec = (pl.BlockSpec((Np, H1p), lambda i, k: (0, 0)) if m_res
              else pl.BlockSpec((tk, H1p), lambda i, k: (k, 0)))
    h_spec = (pl.BlockSpec((NH, Np, H2p), lambda i, k: (0, 0, 0)) if h_res
              else pl.BlockSpec((NH, tk, H2p), lambda i, k: (0, k, 0)))
    return pl.pallas_call(
        functools.partial(_fused_adj_kernel, activate=activate, alpha=alpha,
                          nheads=NH, tk=tk, m_resident=m_res, h_resident=h_res),
        out_shape=(jax.ShapeDtypeStruct((Np, H1p), jnp.float32),
                   jax.ShapeDtypeStruct((NH, Np, H2p), jnp.float32)),
        grid_spec=pltpu.PrefetchScalarGridSpec(
            num_scalar_prefetch=0,
            grid=(Np // tm, Np // tk),
            in_specs=[pl.BlockSpec((tm, tk), lambda i, k: (i, k)),
                      m_spec,
                      pl.BlockSpec((1, H1p), lambda i, k: (0, 0)),
                      h_spec,
                      pl.BlockSpec((NH, tm, 1), lambda i, k: (0, i, 0)),
                      pl.BlockSpec((NH, 1, tk), lambda i, k: (0, 0, k))],
            out_specs=(pl.BlockSpec((tm, H1p), lambda i, k: (i, 0)),
                       pl.BlockSpec((NH, tm, H2p), lambda i, k: (0, i, 0))),
            scratch_shapes=[pltpu.VMEM((NH, tm, 1), jnp.float32),
                            pltpu.VMEM((NH, tm, 1), jnp.float32)]),
        compiler_params=pltpu.CompilerParams(
            dimension_semantics=("parallel", "arbitrary"),
            vmem_limit_bytes=VMEM_LIMIT),
    )(adj, m, b_pad, h, f1, f2t)


# ----------------------------- full forward -----------------------------
def modified_gvcln_snowball_forward(params, x, adj, train_mask, labels_onehot):
    N, nfeat = x.shape
    Np = _round_up(N, LANE)
    tm, tk = _pick_tiles(Np)

    x_p = jnp.pad(x, ((0, Np - N), (0, 0)))
    adj_p = jnp.pad(adj, ((0, Np - N), (0, Np - N))).astype(ADJ_DTYPE)

    nhid1 = params["hidden"][0][0].shape[1] if params["hidden"] else 0
    nclass = params["out"][0].shape[1]
    nhid1_p = _round_up(max(nhid1, 1), LANE)
    nclass_p = _round_up(nclass, LANE)

    alpha = params["alpha"]
    nhid2 = params["att"][0][0].shape[1]
    nhid2_p = _round_up(nhid2, LANE)
    nheads = len(params["att"])

    # ---- GAT head projections (depend only on x); f1/f2 fused in the epilogue ----
    h_heads, f1_heads, f2t_heads = [], [], []
    for (w, a) in params["att"]:
        h_hd, f1_hd, f2_hd = project_concat(
            [x_p], [_pad2(w, nfeat, nhid2_p)], tm,
            out_dtype=jnp.bfloat16, a2h=_pad2(a.T, 2, nhid2_p))
        h_heads.append(h_hd)
        f1_heads.append(f1_hd)                    # (Np, 1)
        f2t_heads.append(f2_hd.reshape(1, Np))    # (1, Np) row layout (no transpose later)
    h_stack = jnp.stack(h_heads, 0)               # (NH, Np, nhid2_p) bf16
    f1_stack = jnp.stack(f1_heads, 0)             # (NH, Np, 1) f32
    f2t_stack = jnp.stack(f2t_heads, 0)           # (NH, 1, Np) f32

    # ---- snowball GCN layers; the first one is fused with the GAT-heads pass ----
    att_heads_out = None
    blocks = []   # f32 (Np, nhid1_p) activations; pad columns are exactly zero
    for li, (w, b) in enumerate(params["hidden"]):
        xs = [x_p]
        ws = [_pad2(w[:nfeat], nfeat, nhid1_p)]
        for j in range(li):
            ws.append(_pad2(w[nfeat + j * nhid1: nfeat + (j + 1) * nhid1],
                            nhid1_p, nhid1_p))
            xs.append(blocks[j])
        m = project_concat(xs, ws, tm, out_dtype=jnp.bfloat16)
        b_pad = _pad2(b.reshape(1, -1), 1, nhid1_p)
        if att_heads_out is None:
            h, att_heads_out = fused_adj_pass(
                adj_p, m, b_pad, h_stack, f1_stack, f2t_stack,
                activate=True, alpha=alpha, tm=tm, tk=tk)
        else:
            h = adj_aggregate(adj_p, m, b_pad, activate=True, tm=tm, tk=tk)
        blocks.append(h)

    # ---- output snowball projection ----
    w_out, b_out = params["out"]
    xs = [x_p]
    ws = [_pad2(w_out[:nfeat], nfeat, nclass_p)]
    for j in range(len(blocks)):
        ws.append(_pad2(w_out[nfeat + j * nhid1: nfeat + (j + 1) * nhid1],
                        nhid1_p, nclass_p))
        xs.append(blocks[j])
    m_out = project_concat(xs, ws, tm, out_dtype=jnp.bfloat16)
    b_out_pad = _pad2(b_out.reshape(1, -1), 1, nclass_p)

    w_oa, a_oa = params["out_att"]

    def out_att_projection(att_heads):
        zcat = jnp.concatenate([att_heads[i, :, :nhid2] for i in range(nheads)],
                               axis=1)                         # (Np, nheads*nhid2)
        return project_concat([zcat], [_pad2(w_oa, zcat.shape[1], nclass_p)], tm,
                              out_dtype=jnp.bfloat16,
                              a2h=_pad2(a_oa.T, 2, nclass_p))

    if att_heads_out is not None:
        # main path (>=1 hidden layer): heads done; fuse out_att with the output layer
        h_oa, f1_oa, f2_oa = out_att_projection(att_heads_out)
        y_pad, z_att = fused_adj_pass(
            adj_p, m_out, b_out_pad, h_oa[None], f1_oa[None],
            f2_oa.reshape(1, 1, Np), activate=False, alpha=alpha, tm=tm, tk=tk)
    else:
        # nlayers == 0: fuse the GAT heads with the output layer, then run the
        # out_att pass through the same fused kernel with a dummy GCN slot.
        y_pad, att_heads_out = fused_adj_pass(
            adj_p, m_out, b_out_pad, h_stack, f1_stack, f2t_stack,
            activate=False, alpha=alpha, tm=tm, tk=tk)
        h_oa, f1_oa, f2_oa = out_att_projection(att_heads_out)
        dummy_m = jnp.zeros((Np, LANE), jnp.bfloat16)
        dummy_b = jnp.zeros((1, LANE), jnp.float32)
        _, z_att = fused_adj_pass(
            adj_p, dummy_m, dummy_b, h_oa[None], f1_oa[None],
            f2_oa.reshape(1, 1, Np), activate=False, alpha=alpha, tm=tm, tk=tk)

    y = y_pad[:N, :nclass]
    z = z_att[0, :N, :nclass]

    # ---- losses: O(N*nclass), plain JAX (a pallas_call here is pure overhead) ----
    logpy = jax.nn.log_softmax(y, axis=1)
    logpz = jax.nn.log_softmax(z, axis=1)
    mask = train_mask.reshape(-1)
    n_train = jnp.sum(mask)
    semi_loss_1 = jnp.sum(-jnp.sum(logpy * labels_onehot, axis=1) * mask) / n_train
    semi_loss_2 = jnp.sum(-jnp.sum(logpz * labels_onehot, axis=1) * mask) / n_train
    cl_loss_12 = jnp.sum(jnp.mean(-jnp.exp(logpz) * logpy, axis=0))
    loss_11 = semi_loss_1
    loss_21 = semi_loss_2
    loss_12 = semi_loss_1 + params["b1"] * cl_loss_12
    loss_22 = semi_loss_2 + params["b2"] * cl_loss_12
    return y, z, loss_11, loss_21, loss_12, loss_22


if __name__ == "__main__":
    # N deliberately NOT a multiple of 128: exercises the pad-to-tile path.
    # Np = 512 -> tm=256 (2 'parallel' row tiles for megacore), tk=512.
    N = 500
    nfeat = 16
    nlayers_1 = 2
    nhid_1 = 16
    nclass_1 = 4
    nhid_2 = 8
    nheads_2 = 2
    alpha_2 = 0.2

    key = jax.random.PRNGKey(0)
    keys = jax.random.split(key, 32)

    x = jax.random.normal(keys[0], (N, nfeat), jnp.float32)

    # random symmetric adjacency with self-loops, symmetrically normalized
    a = (jax.random.uniform(keys[1], (N, N)) < 0.02).astype(jnp.float32)
    a = jnp.maximum(a, a.T)
    a = jnp.minimum(a + jnp.eye(N, dtype=jnp.float32), 1.0)
    deg = jnp.sum(a, axis=1)
    dinv = 1.0 / jnp.sqrt(deg)
    adj = a * dinv[:, None] * dinv[None, :]

    labels = jax.random.randint(keys[2], (N,), 0, nclass_1)
    labels_onehot = jax.nn.one_hot(labels, nclass_1, dtype=jnp.float32)
    train_mask = (jnp.arange(N) < N // 4).astype(jnp.float32)   # idx_train as mask

    def init_w(k, shape, scale=0.1):
        return scale * jax.random.normal(k, shape, jnp.float32)

    ki = 3
    hidden = []
    for l in range(nlayers_1):
        fin = l * nhid_1 + nfeat
        hidden.append((init_w(keys[ki], (fin, nhid_1)),
                       init_w(keys[ki + 1], (nhid_1,))))
        ki += 2
    out_w = init_w(keys[ki], (nlayers_1 * nhid_1 + nfeat, nclass_1)); ki += 1
    out_b = init_w(keys[ki], (nclass_1,)); ki += 1

    att = []
    for h in range(nheads_2):
        att.append((init_w(keys[ki], (nfeat, nhid_2)),
                    init_w(keys[ki + 1], (nhid_2, 2))))   # a stored as (H, 2) = (a1|a2)
        ki += 2
    out_att = (init_w(keys[ki], (nhid_2 * nheads_2, nclass_1)),
               init_w(keys[ki + 1], (nclass_1, 2)))
    ki += 2

    params = dict(hidden=hidden, out=(out_w, out_b), att=att, out_att=out_att,
                  alpha=alpha_2, b1=0.05, b2=0.05)

    outs = modified_gvcln_snowball_forward(params, x, adj, train_mask, labels_onehot)
    outs = jax.block_until_ready(outs)
    y, z, l11, l21, l12, l22 = outs
    assert y.shape == (N, nclass_1) and z.shape == (N, nclass_1)
    assert all(bool(jnp.isfinite(v).all()) for v in (y, z, l11, l21, l12, l22))
    print("KERNEL_OK")
</pallas_src>

<mosaic_0001>
module attributes {stable_mosaic.version = 11 : i64} {
  func.func @_project_kernel(%arg0: i32, %arg1: memref<256x16xf32, #tpu.memory_space<vmem>>, %arg2: memref<16x128xf32, #tpu.memory_space<vmem>>, %arg3: memref<2x128xf32, #tpu.memory_space<vmem>>, %arg4: memref<256x128xbf16, #tpu.memory_space<vmem>>, %arg5: memref<256x1xf32, #tpu.memory_space<vmem>>, %arg6: memref<256x1xf32, #tpu.memory_space<vmem>>) attributes {dimension_semantics = [#tpu.dimension_semantics<parallel>], iteration_bounds = array<i64: 2>, scalar_prefetch = 0 : i64, scratch_operands = 0 : i64, tpu.core_type = #tpu.core_type<tc>, window_params = [{transform_indices = @transform_0, window_bounds = array<i64: 256, 16>}, {pipeline_mode = #tpu.pipeline_mode<synchronous>, transform_indices = @transform_1, window_bounds = array<i64: 16, 128>}, {pipeline_mode = #tpu.pipeline_mode<synchronous>, transform_indices = @transform_2, window_bounds = array<i64: 2, 128>}, {transform_indices = @transform_3, window_bounds = array<i64: 256, 128>}, {transform_indices = @transform_4, window_bounds = array<i64: 256, 1>}, {transform_indices = @transform_5, window_bounds = array<i64: 256, 1>}]} {
    %c0 = arith.constant 0 : index
    %c0_0 = arith.constant 0 : index
    %0 = vector.load %arg1[%c0, %c0_0] : memref<256x16xf32, #tpu.memory_space<vmem>>, vector<256x16xf32>
    %c0_1 = arith.constant 0 : index
    %c0_2 = arith.constant 0 : index
    %1 = vector.load %arg2[%c0_1, %c0_2] : memref<16x128xf32, #tpu.memory_space<vmem>>, vector<16x128xf32>
    %cst = arith.constant dense<0.000000e+00> : vector<256x128xf32>
    %2 = tpu.matmul %0, %1, %cst {dimension_numbers = #tpu.dot_dimension_numbers<[1], [0], [0], [1], [0, 0, 1, 1], [], []>} : vector<256x16xf32>, vector<16x128xf32>, vector<256x128xf32> -> vector<256x128xf32>
    %3 = arith.truncf %2 : vector<256x128xf32> to vector<256x128xbf16>
    %c0_3 = arith.constant 0 : index
    %c0_4 = arith.constant 0 : index
    %4 = vector.load %arg4[%c0_3, %c0_4] : memref<256x128xbf16, #tpu.memory_space<vmem>>, vector<256x128xbf16>
    tpu.vector_store %arg4[%c0_3, %c0_4], %3 {strides = array<i32>} : memref<256x128xbf16, #tpu.memory_space<vmem>>, vector<256x128xbf16>,
    %c0_5 = arith.constant 0 : index
    %c0_6 = arith.constant 0 : index
    %5 = vector.load %arg3[%c0_5, %c0_6] : memref<2x128xf32, #tpu.memory_space<vmem>>, vector<1x128xf32>
    %6 = vector.broadcast %5 : vector<1x128xf32> to vector<256x128xf32>
    %7 = arith.mulf %2, %6 : vector<256x128xf32>
    %cst_7 = arith.constant dense<0.000000e+00> : vector<256xf32>
    %8 = vector.multi_reduction <add>, %7, %cst_7 [1] : vector<256x128xf32> to vector<256xf32>
    %9 = vector.shape_cast %8 : vector<256xf32> to vector<256x1xf32>
    %c0_8 = arith.constant 0 : index
    %c0_9 = arith.constant 0 : index
    %10 = vector.load %arg5[%c0_8, %c0_9] : memref<256x1xf32, #tpu.memory_space<vmem>>, vector<256x1xf32>
    tpu.vector_store %arg5[%c0_8, %c0_9], %9 {strides = array<i32>} : memref<256x1xf32, #tpu.memory_space<vmem>>, vector<256x1xf32>,
    %c1 = arith.constant 1 : index
    %c0_10 = arith.constant 0 : index
    %11 = vector.load %arg3[%c1, %c0_10] : memref<2x128xf32, #tpu.memory_space<vmem>>, vector<1x128xf32>
    %12 = vector.broadcast %11 : vector<1x128xf32> to vector<256x128xf32>
    %13 = arith.mulf %2, %12 : vector<256x128xf32>
    %cst_11 = arith.constant dense<0.000000e+00> : vector<256xf32>
    %14 = vector.multi_reduction <add>, %13, %cst_11 [1] : vector<256x128xf32> to vector<256xf32>
    %15 = vector.shape_cast %14 : vector<256xf32> to vector<256x1xf32>
    %c0_12 = arith.constant 0 : index
    %c0_13 = arith.constant 0 : index
    %16 = vector.load %arg6[%c0_12, %c0_13] : memref<256x1xf32, #tpu.memory_space<vmem>>, vector<256x1xf32>
    tpu.vector_store %arg6[%c0_12, %c0_13], %15 {strides = array<i32>} : memref<256x1xf32, #tpu.memory_space<vmem>>, vector<256x1xf32>,
    return
  }
  func.func @transform_0(%arg0: i32) -> (i32, i32) {
    %c0_i32 = arith.constant 0 : i32
    %c0_i32_0 = arith.constant 0 : i32
    return %arg0, %c0_i32 : i32, i32
  }
  func.func @transform_1(%arg0: i32) -> (i32, i32) {
    %c0_i32 = arith.constant 0 : i32
    %c0_i32_0 = arith.constant 0 : i32
    %c0_i32_1 = arith.constant 0 : i32
    return %c0_i32, %c0_i32_0 : i32, i32
  }
  func.func @transform_2(%arg0: i32) -> (i32, i32) {
    %c0_i32 = arith.constant 0 : i32
    %c0_i32_0 = arith.constant 0 : i32
    %c0_i32_1 = arith.constant 0 : i32
    return %c0_i32, %c0_i32_0 : i32, i32
  }
  func.func @transform_3(%arg0: i32) -> (i32, i32) {
    %c0_i32 = arith.constant 0 : i32
    %c0_i32_0 = arith.constant 0 : i32
    return %arg0, %c0_i32 : i32, i32
  }
  func.func @transform_4(%arg0: i32) -> (i32, i32) {
    %c0_i32 = arith.constant 0 : i32
    %c0_i32_0 = arith.constant 0 : i32
    return %arg0, %c0_i32 : i32, i32
  }
  func.func @transform_5(%arg0: i32) -> (i32, i32) {
    %c0_i32 = arith.constant 0 : i32
    %c0_i32_0 = arith.constant 0 : i32
    return %arg0, %c0_i32 : i32, i32
  }
}

</mosaic_0001>

<llo_original>
// kernel: tpu_custom_call.1
$region0: #{tpu_custom_call.1}
  #allocation0 [shape = 'u32[]', space=smem, size = 0x4, offset = 0x4, fixed_abs, tag = 'smem constant byte address 0x4 - core index']
  #allocation1 [shape = 'u32[72,128]{1,0:T(1,128)}', space=vmem, size = 0x9000, scoped, tag = 'internal scratch']
  %s0 = inlined_call_operand.vmem [shape: f32[512,16], index: 0, kind: input, shape index: {}]
  %s1 = inlined_call_operand.vmem [shape: f32[16,128], index: 1, kind: input, shape index: {}]
  %s2 = inlined_call_operand.vmem [shape: f32[2,128], index: 2, kind: input, shape index: {}]
  %s3 = inlined_call_operand.hbm [shape: bf16[512,128], index: 3, kind: output, shape index: {0}]
  %s4 = inlined_call_operand.vmem [shape: f32[512,1], index: 4, kind: output, shape index: {1}]
  %s5 = inlined_call_operand.vmem [shape: f32[512,1], index: 5, kind: output, shape index: {2}]
  %6 = xla_tuple %s3, %s4, %s5
  %s7 = sld [smem:[#allocation0]]
  $region61: #{tpu_custom_call.1} parent=0
    _
  %s9 = ssub.s32 1, %s7
  %s10 = scalar_select 0, %s9, %s7
  $region1: #{tpu_custom_call.1} parent=0
    #allocation2 [shape = 'u8[131072]{0}', space=vmem, size = 0x20000, scoped, tag = 'output window, operand 0']
    #allocation3 [shape = 's32[2]{0}', space=sflag, size = 0x8, scoped, tag = 'scoped memory for tpu_custom_call.1']
    %11 = vsyncpa [#allocation3], 0
    %s12 = scalar_lea.sflag [#allocation3], 1
    %13 = vsyncpa %s12, 0
    loop: start=0, step=1, limit=4
    $region2: #{tpu_custom_call.1} parent=1 // loop_pre_header
      _
    $region3: #{tpu_custom_call.1} parent=1 // loop_header
      %s15 = sphi 0, %s19
      %p16 = scmp.ge.s32.totalorder %s15, 4
      %s25 = sphi 0, %s27
      %s28 = sphi 0, %s25
      %s29 = sphi 0, %s28
      %s45 = sphi 0, %s29
      %s49 = sphi 0, %s49
      %s51 = sphi 0, %s49
      %s52 = sphi 0, %s51
      %s66 = sphi 0, %s52
      %s70 = sphi 0, %s70
      %s72 = sphi 0, %s70
      %s73 = sphi 0, %s72
      %s87 = sphi 0, %s73
      %s93 = sphi 0, %s95
      %s96 = sphi 0, %s93
      %s97 = sphi 0, %s96
      %s113 = sphi 0, %s97
      %s119 = sphi 0, %s121
      %s122 = sphi 0, %s119
      %s123 = sphi 0, %s122
      %s139 = sphi 0, %s123
      %s145 = sphi 0, %s147
      %s148 = sphi 0, %s145
      %s149 = sphi 0, %s148
      %s165 = sphi 0, %s149
    $region4: #{tpu_custom_call.1} parent=1 // loop_header_branch
      %18 = sbr.rel (%p16) target = $region8
    $region5: #{tpu_custom_call.1} parent=1 // loop_body
      %s20 = ssub.s32 %s15, 1
      %s21 = ssub.s32 %s15, 2
      %s22 = sadd.s32 %s15, 1
      %s23 = ssub.s32 %s15, %s22
      %p24 = scmp.eq.s32.totalorder %s23, 0
      %s26 = sadd.s32 %s25, 1
      %s27 = scalar_select %p24, %s25, %s26
      %p30 = pneg %p24
      %p31 = scmp.eq.s32.totalorder %s15, 1
      %p32 = por %p30, %p31
      %p33 = scmp.ne.s32.totalorder %s25, %s28
      %p34 = scmp.eq.s32.totalorder %s15, 0
      %p35 = por %p33, %p34
      %p36 = scmp.ne.s32.totalorder %s25, %s28
      %p37 = scmp.eq.s32.totalorder %s20, 1
      %p38 = por %p36, %p37
      %p39 = scmp.ne.s32.totalorder %s28, %s29
      %p40 = scmp.eq.s32.totalorder %s20, 0
      %p41 = por %p39, %p40
      %p42 = scmp.ne.s32.totalorder %s28, %s29
      %p43 = scmp.eq.s32.totalorder %s21, 1
      %p44 = por %p42, %p43
      %p46 = scmp.ne.s32.totalorder %s29, %s45
      %p47 = scmp.eq.s32.totalorder %s21, 0
      %p48 = por %p46, %p47
      %s50 = sadd.s32 %s49, 1
      %p53 = scmp.eq.s32.totalorder %s15, 1
      %p54 = scmp.ne.s32.totalorder %s49, %s51
      %p55 = scmp.eq.s32.totalorder %s15, 0
      %p56 = por %p54, %p55
      %p57 = scmp.ne.s32.totalorder %s49, %s51
      %p58 = scmp.eq.s32.totalorder %s20, 1
      %p59 = por %p57, %p58
      %p60 = scmp.ne.s32.totalorder %s51, %s52
      %p61 = scmp.eq.s32.totalorder %s20, 0
      %p62 = por %p60, %p61
      %p63 = scmp.ne.s32.totalorder %s51, %s52
      %p64 = scmp.eq.s32.totalorder %s21, 1
      %p65 = por %p63, %p64
      %p67 = scmp.ne.s32.totalorder %s52, %s66
      %p68 = scmp.eq.s32.totalorder %s21, 0
      %p69 = por %p67, %p68
      %s71 = sadd.s32 %s70, 1
      %p74 = scmp.eq.s32.totalorder %s15, 1
      %p75 = scmp.ne.s32.totalorder %s70, %s72
      %p76 = scmp.eq.s32.totalorder %s15, 0
      %p77 = por %p75, %p76
      %p78 = scmp.ne.s32.totalorder %s70, %s72
      %p79 = scmp.eq.s32.totalorder %s20, 1
      %p80 = por %p78, %p79
      %p81 = scmp.ne.s32.totalorder %s72, %s73
      %p82 = scmp.eq.s32.totalorder %s20, 0
      %p83 = por %p81, %p82
      %p84 = scmp.ne.s32.totalorder %s72, %s73
      %p85 = scmp.eq.s32.totalorder %s21, 1
      %p86 = por %p84, %p85
      %p88 = scmp.ne.s32.totalorder %s73, %s87
      %p89 = scmp.eq.s32.totalorder %s21, 0
      %p90 = por %p88, %p89
      %s91 = ssub.s32 %s15, %s22
      %p92 = scmp.eq.s32.totalorder %s91, 0
      %s94 = sadd.s32 %s93, 1
      %s95 = scalar_select %p92, %s93, %s94
      %p98 = pneg %p92
      %p99 = scmp.eq.s32.totalorder %s15, 1
      %p100 = por %p98, %p99
      %p101 = scmp.ne.s32.totalorder %s93, %s96
      %p102 = scmp.eq.s32.totalorder %s15, 0
      %p103 = por %p101, %p102
      %p104 = scmp.ne.s32.totalorder %s93, %s96
      %p105 = scmp.eq.s32.totalorder %s20, 1
      %p106 = por %p104, %p105
      %p107 = scmp.ne.s32.totalorder %s96, %s97
      %p108 = scmp.eq.s32.totalorder %s20, 0
      %p109 = por %p107, %p108
      %p110 = scmp.ne.s32.totalorder %s96, %s97
      %p111 = scmp.eq.s32.totalorder %s21, 1
      %p112 = por %p110, %p111
      %p114 = scmp.ne.s32.totalorder %s97, %s113
      %p115 = scmp.eq.s32.totalorder %s21, 0
      %p116 = por %p114, %p115
      %s117 = ssub.s32 %s15, %s22
      %p118 = scmp.eq.s32.totalorder %s117, 0
      %s120 = sadd.s32 %s119, 1
      %s121 = scalar_select %p118, %s119, %s120
      %p124 = pneg %p118
      %p125 = scmp.eq.s32.totalorder %s15, 1
      %p126 = por %p124, %p125
      %p127 = scmp.ne.s32.totalorder %s119, %s122
      %p128 = scmp.eq.s32.totalorder %s15, 0
      %p129 = por %p127, %p128
      %p130 = scmp.ne.s32.totalorder %s119, %s122
      %p131 = scmp.eq.s32.totalorder %s20, 1
      %p132 = por %p130, %p131
      %p133 = scmp.ne.s32.totalorder %s122, %s123
      %p134 = scmp.eq.s32.totalorder %s20, 0
      %p135 = por %p133, %p134
      %p136 = scmp.ne.s32.totalorder %s122, %s123
      %p137 = scmp.eq.s32.totalorder %s21, 1
      %p138 = por %p136, %p137
      %p140 = scmp.ne.s32.totalorder %s123, %s139
      %p141 = scmp.eq.s32.totalorder %s21, 0
      %p142 = por %p140, %p141
      %s143 = ssub.s32 %s15, %s22
      %p144 = scmp.eq.s32.totalorder %s143, 0
      %s146 = sadd.s32 %s145, 1
      %s147 = scalar_select %p144, %s145, %s146
      %p150 = pneg %p144
      %p151 = scmp.eq.s32.totalorder %s15, 1
      %p152 = por %p150, %p151
      %p153 = scmp.ne.s32.totalorder %s145, %s148
      %p154 = scmp.eq.s32.totalorder %s15, 0
      %p155 = por %p153, %p154
      %p156 = scmp.ne.s32.totalorder %s145, %s148
      %p157 = scmp.eq.s32.totalorder %s20, 1
      %p158 = por %p156, %p157
      %p159 = scmp.ne.s32.totalorder %s148, %s149
      %p160 = scmp.eq.s32.totalorder %s20, 0
      %p161 = por %p159, %p160
      %p162 = scmp.ne.s32.totalorder %s148, %s149
      %p163 = scmp.eq.s32.totalorder %s21, 1
      %p164 = por %p162, %p163
      %p166 = scmp.ne.s32.totalorder %s149, %s165
      %p167 = scmp.eq.s32.totalorder %s21, 0
      %p168 = por %p166, %p167
      %p169 = scmp.le.s32.totalorder 1, %s15
      %p170 = scmp.lt.s32.totalorder %s15, 3
      %p171 = pnand %p169, %p170
      %p172 = pneg %p171
      // Predicated region
      $region9: #{tpu_custom_call.1} parent=5 // pred_check
        _
      $region10: #{tpu_custom_call.1} parent=5 // pred_check_branch
        %174 = sbr.rel (%p171) target = $region12
      $region11: #{tpu_custom_call.1} parent=5 // pred_region
        %s175 = ssub.s32 %s15, 1
        // Predicated region
        $region13: #{tpu_custom_call.1} parent=11 // pred_check
          %p176 = pneg %p62
        $region14: #{tpu_custom_call.1} parent=11 // pred_check_branch
          %178 = sbr.rel (%p176) target = $region16
        $region15: #{tpu_custom_call.1} parent=11 // pred_region
          _
        $region16: #{tpu_custom_call.1} parent=11 // pred_fallthru
          _
        // Predicated region
        $region17: #{tpu_custom_call.1} parent=11 // pred_check
          %p179 = pneg %p83
        $region18: #{tpu_custom_call.1} parent=11 // pred_check_branch
          %181 = sbr.rel (%p179) target = $region20
        $region19: #{tpu_custom_call.1} parent=11 // pred_region
          _
        $region20: #{tpu_custom_call.1} parent=11 // pred_fallthru
          _
      $region12: #{tpu_custom_call.1} parent=5 // pred_fallthru
        _
      %p182 = scmp.lt.s32.totalorder %s15, 2
      // Predicated region
      $region21: #{tpu_custom_call.1} parent=5 // pred_check
        %p183 = pneg %p182
      $region22: #{tpu_custom_call.1} parent=5 // pred_check_branch
        %185 = sbr.rel (%p183) target = $region24
      $region23: #{tpu_custom_call.1} parent=5 // pred_region
        // Predicated region
        $region25: #{tpu_custom_call.1} parent=23 // pred_check
          %p186 = pneg %p35
        $region26: #{tpu_custom_call.1} parent=23 // pred_check_branch
          %188 = sbr.rel (%p186) target = $region28
        $region27: #{tpu_custom_call.1} parent=23 // pred_region
          %s189 = smul.u32 32, %s15
          %p190 = scmp.lt.s32.totalorder %s189, 63
          %s191 = scalar_select %p190, %s189, 63
          %s192 = smul.addr %s191, 8
          %s193 = scalar_lea.vmem %s0, %s192
          %s194 = smul.u32 32, %s15
        $region28: #{tpu_custom_call.1} parent=23 // pred_fallthru
          _
      $region24: #{tpu_custom_call.1} parent=5 // pred_fallthru
        _
      %p195 = scmp.le.s32.totalorder 1, %s15
      %p196 = scmp.lt.s32.totalorder %s15, 3
      %p197 = pnand %p195, %p196
      %p198 = pneg %p197
      // Predicated region
      $region29: #{tpu_custom_call.1} parent=5 // pred_check
        _
      $region30: #{tpu_custom_call.1} parent=5 // pred_check_branch
        %200 = sbr.rel (%p197) target = $region32
      $region31: #{tpu_custom_call.1} parent=5 // pred_region
        %s201 = ssub.s32 %s15, 1
        %s202 = smul.u32 32, %s20
        %p203 = scmp.lt.s32.totalorder %s202, 63
        %s204 = scalar_select %p203, %s202, 63
        %s205 = smul.addr %s204, 8
        %s206 = scalar_lea.vmem %s0, %s205
        %p207 = pneg %p41
        %p208 = pneg %p38
        %p209 = pneg %p62
        %p210 = pneg %p59
        %p211 = pneg %p83
        %p212 = pneg %p80
        %p213 = pneg %p109
        %p214 = pneg %p106
        %s215 = sand.u32 %s96, 1
        %s216 = scalar_lea.sflag [#allocation3], %s215
        %s217 = sand.u32 %s96, 1
        %s218 = smul.addr %s217, 128
        %s219 = scalar_lea.vmem [#allocation2], %s218
        %p220 = pneg %p135
        %p221 = pneg %p132
        %s222 = smul.u32 32, %s20
        %p223 = scmp.lt.s32.totalorder %s222, 63
        %s224 = scalar_select %p223, %s222, 63
        %s225 = smul.addr %s224, 8
        %s226 = scalar_lea.vmem %s4, %s225
        %p227 = pneg %p161
        %p228 = pneg %p158
        %s229 = smul.u32 32, %s20
        %p230 = scmp.lt.s32.totalorder %s229, 63
        %s231 = scalar_select %p230, %s229, 63
        %s232 = smul.addr %s231, 8
        %s233 = scalar_lea.vmem %s5, %s232
        %s234 = smul.u32 32, %s20
        %p235 = scmp.lt.s32.totalorder %s234, 63
        %s236 = scalar_select %p235, %s234, 63
        %s237 = smul.addr %s236, 8
        %s238 = scalar_lea.vmem %s0, %s237
        %s239 = smul.u32 32, %s20
        %s240 = smul.u32 32, %s20
        %s241 = smul.u32 32, %s20
        %p242 = scmp.lt.s32.totalorder %s241, 63
        %s243 = scalar_select %p242, %s241, 63
        %s244 = smul.addr %s243, 8
        %s245 = scalar_lea.vmem %s4, %s244
        %s246 = smul.u32 32, %s20
        %s247 = smul.u32 32, %s20
        %p248 = scmp.lt.s32.totalorder %s247, 63
        %s249 = scalar_select %p248, %s247, 63
        %s250 = smul.addr %s249, 8
        %s251 = scalar_lea.vmem %s5, %s250
        %s252 = smul.u32 32, %s20
        %v253 = vld [vmem:[%s238] sm:$0xff]
        %v254 = vld [vmem:[%s238 + $0x8] sm:$0xff]
        %v255 = vld [vmem:[%s238 + $0x10] sm:$0xff]
        %v256 = vld [vmem:[%s238 + $0x18] sm:$0xff]
        %v257 = vld [vmem:[%s238 + $0x20] sm:$0xff]
        %v258 = vld [vmem:[%s238 + $0x28] sm:$0xff]
        %v259 = vld [vmem:[%s238 + $0x30] sm:$0xff]
        %v260 = vld [vmem:[%s238 + $0x38] sm:$0xff]
        %v261 = vld [vmem:[%s238 + $0x40] sm:$0xff]
        %v262 = vld [vmem:[%s238 + $0x48] sm:$0xff]
        %v263 = vld [vmem:[%s238 + $0x50] sm:$0xff]
        %v264 = vld [vmem:[%s238 + $0x58] sm:$0xff]
        %v265 = vld [vmem:[%s238 + $0x60] sm:$0xff]
        %v266 = vld [vmem:[%s238 + $0x68] sm:$0xff]
        %v267 = vld [vmem:[%s238 + $0x70] sm:$0xff]
        %v268 = vld [vmem:[%s238 + $0x78] sm:$0xff]
        %v269 = vld [vmem:[%s238 + $0x80] sm:$0xff]
        %v270 = vld [vmem:[%s238 + $0x88] sm:$0xff]
        %v271 = vld [vmem:[%s238 + $0x90] sm:$0xff]
        %v272 = vld [vmem:[%s238 + $0x98] sm:$0xff]
        %v273 = vld [vmem:[%s238 + $0xa0] sm:$0xff]
        %v274 = vld [vmem:[%s238 + $0xa8] sm:$0xff]
        %v275 = vld [vmem:[%s238 + $0xb0] sm:$0xff]
        %v276 = vld [vmem:[%s238 + $0xb8] sm:$0xff]
        %v277 = vld [vmem:[%s238 + $0xc0] sm:$0xff]
        %v278 = vld [vmem:[%s238 + $0xc8] sm:$0xff]
        %v279 = vld [vmem:[%s238 + $0xd0] sm:$0xff]
        %v280 = vld [vmem:[%s238 + $0xd8] sm:$0xff]
        %v281 = vld [vmem:[%s238 + $0xe0] sm:$0xff]
        %v282 = vld [vmem:[%s238 + $0xe8] sm:$0xff]
        %v283 = vld [vmem:[%s238 + $0xf0] sm:$0xff]
        %v284 = vld [vmem:[%s238 + $0xf8] sm:$0xff]
        %v285 = vld [vmem:[%s1] sm:$0xff]
        %v286 = vld [vmem:[%s1 + $0x8] sm:$0xff]
        %vm287 = vcmask 130048
        %v289 = vsel %vm287, %v253, 0
        %v292 = vsel %vm287, %v254, 0
        %v295 = vsel %vm287, %v255, 0
        %v298 = vsel %vm287, %v256, 0
        %v301 = vsel %vm287, %v257, 0
        %v304 = vsel %vm287, %v258, 0
        %v307 = vsel %vm287, %v259, 0
        %v310 = vsel %vm287, %v260, 0
        %v313 = vsel %vm287, %v261, 0
        %v316 = vsel %vm287, %v262, 0
        %v319 = vsel %vm287, %v263, 0
        %v322 = vsel %vm287, %v264, 0
        %v325 = vsel %vm287, %v265, 0
        %v328 = vsel %vm287, %v266, 0
        %v331 = vsel %vm287, %v267, 0
        %v334 = vsel %vm287, %v268, 0
        %v337 = vsel %vm287, %v269, 0
        %v340 = vsel %vm287, %v270, 0
        %v343 = vsel %vm287, %v271, 0
        %v346 = vsel %vm287, %v272, 0
        %v349 = vsel %vm287, %v273, 0
        %v352 = vsel %vm287, %v274, 0
        %v355 = vsel %vm287, %v275, 0
        %v358 = vsel %vm287, %v276, 0
        %v361 = vsel %vm287, %v277, 0
        %v364 = vsel %vm287, %v278, 0
        %v367 = vsel %vm287, %v279, 0
        %v370 = vsel %vm287, %v280, 0
        %v373 = vsel %vm287, %v281, 0
        %v376 = vsel %vm287, %v282, 0
        %v379 = vsel %vm287, %v283, 0
        %v382 = vsel %vm287, %v284, 0
        %384 = vmatpush.msra.mxu0 0.0
        %385 = vmatpush.msra.mxu0 0.0
        %386 = vmatpush.msra.mxu0 0.0
        %387 = vmatpush.msra.mxu0 0.0
        %388 = vmatpush.msra.mxu0 0.0
        %389 = vmatpush.msra.mxu0 0.0
        %390 = vmatpush.msra.mxu0 0.0
        %391 = vmatpush.msra.mxu0 0.0
        %392 = vmatpush.msra.mxu0 0.0
        %393 = vmatpush.msra.mxu0 0.0
        %394 = vmatpush.msra.mxu0 0.0
        %395 = vmatpush.msra.mxu0 0.0
        %396 = vmatpush.msra.mxu0 0.0
        %397 = vmatpush.msra.mxu0 0.0
        %398 = vmatpush.msra.mxu0 %v286
        %399 = vmatpush.msra.mxu0 %v285
        %400 = vmatmul.f32.gmra.mxu0 %v289
        %v401 = vpop.f32.mrf.mxu0
        %v402 = vadd.f32 0.0, %v401
        %403 = vmatmul.f32.gmra.mxu0 %v292
        %v404 = vpop.f32.mrf.mxu0
        %v405 = vadd.f32 0.0, %v404
        %406 = vmatmul.f32.gmra.mxu0 %v295
        %v407 = vpop.f32.mrf.mxu0
        %v408 = vadd.f32 0.0, %v407
        %409 = vmatmul.f32.gmra.mxu0 %v298
        %v410 = vpop.f32.mrf.mxu0
        %v411 = vadd.f32 0.0, %v410
        %412 = vmatmul.f32.gmra.mxu0 %v301
        %v413 = vpop.f32.mrf.mxu0
        %v414 = vadd.f32 0.0, %v413
        %415 = vmatmul.f32.gmra.mxu0 %v304
        %v416 = vpop.f32.mrf.mxu0
        %v417 = vadd.f32 0.0, %v416
        %418 = vmatmul.f32.gmra.mxu0 %v307
        %v419 = vpop.f32.mrf.mxu0
        %v420 = vadd.f32 0.0, %v419
        %421 = vmatmul.f32.gmra.mxu0 %v310
        %v422 = vpop.f32.mrf.mxu0
        %v423 = vadd.f32 0.0, %v422
        %424 = vmatmul.f32.gmra.mxu0 %v313
        %v425 = vpop.f32.mrf.mxu0
        %v426 = vadd.f32 0.0, %v425
        %427 = vmatmul.f32.gmra.mxu0 %v316
        %v428 = vpop.f32.mrf.mxu0
        %v429 = vadd.f32 0.0, %v428
        %430 = vmatmul.f32.gmra.mxu0 %v319
        %v431 = vpop.f32.mrf.mxu0
        %v432 = vadd.f32 0.0, %v431
        %433 = vmatmul.f32.gmra.mxu0 %v322
        %v434 = vpop.f32.mrf.mxu0
        %v435 = vadd.f32 0.0, %v434
        %436 = vmatmul.f32.gmra.mxu0 %v325
        %v437 = vpop.f32.mrf.mxu0
        %v438 = vadd.f32 0.0, %v437
        %439 = vmatmul.f32.gmra.mxu0 %v328
        %v440 = vpop.f32.mrf.mxu0
        %v441 = vadd.f32 0.0, %v440
        %442 = vmatmul.f32.gmra.mxu0 %v331
        %v443 = vpop.f32.mrf.mxu0
        %v444 = vadd.f32 0.0, %v443
        %445 = vmatmul.f32.gmra.mxu0 %v334
        %v446 = vpop.f32.mrf.mxu0
        %v447 = vadd.f32 0.0, %v446
        %448 = vmatmul.f32.gmra.mxu0 %v337
        %v449 = vpop.f32.mrf.mxu0
        %v450 = vadd.f32 0.0, %v449
        %451 = vmatmul.f32.gmra.mxu0 %v340
        %v452 = vpop.f32.mrf.mxu0
        %v453 = vadd.f32 0.0, %v452
        %454 = vmatmul.f32.gmra.mxu0 %v343
        %v455 = vpop.f32.mrf.mxu0
        %v456 = vadd.f32 0.0, %v455
        %457 = vmatmul.f32.gmra.mxu0 %v346
        %v458 = vpop.f32.mrf.mxu0
        %v459 = vadd.f32 0.0, %v458
        %460 = vmatmul.f32.gmra.mxu0 %v349
        %v461 = vpop.f32.mrf.mxu0
        %v462 = vadd.f32 0.0, %v461
        %463 = vmatmul.f32.gmra.mxu0 %v352
        %v464 = vpop.f32.mrf.mxu0
        %v465 = vadd.f32 0.0, %v464
        %466 = vmatmul.f32.gmra.mxu0 %v355
        %v467 = vpop.f32.mrf.mxu0
        %v468 = vadd.f32 0.0, %v467
        %469 = vmatmul.f32.gmra.mxu0 %v358
        %v470 = vpop.f32.mrf.mxu0
        %v471 = vadd.f32 0.0, %v470
        %472 = vmatmul.f32.gmra.mxu0 %v361
        %v473 = vpop.f32.mrf.mxu0
        %v474 = vadd.f32 0.0, %v473
        %475 = vmatmul.f32.gmra.mxu0 %v364
        %v476 = vpop.f32.mrf.mxu0
        %v477 = vadd.f32 0.0, %v476
        %478 = vmatmul.f32.gmra.mxu0 %v367
        %v479 = vpop.f32.mrf.mxu0
        %v480 = vadd.f32 0.0, %v479
        %481 = vmatmul.f32.gmra.mxu0 %v370
        %v482 = vpop.f32.mrf.mxu0
        %v483 = vadd.f32 0.0, %v482
        %484 = vmatmul.f32.gmra.mxu0 %v373
        %v485 = vpop.f32.mrf.mxu0
        %v486 = vadd.f32 0.0, %v485
        %487 = vmatmul.f32.gmra.mxu0 %v376
        %v488 = vpop.f32.mrf.mxu0
        %v489 = vadd.f32 0.0, %v488
        %490 = vmatmul.f32.gmra.mxu0 %v379
        %v491 = vpop.f32.mrf.mxu0
        %v492 = vadd.f32 0.0, %v491
        %493 = vmatmul.f32.gmra.mxu0 %v382
        %v494 = vpop.f32.mrf.mxu0
        %v495 = vadd.f32 0.0, %v494
        %496 = vdwg.mxu0
        %v497 = vpack.c.bf16 %v402, %v402
        %v498 = vpack.c.bf16 %v405, %v405
        %v499 = vpack.c.bf16 %v408, %v408
        %v500 = vpack.c.bf16 %v411, %v411
        %v501 = vpack.c.bf16 %v414, %v414
        %v502 = vpack.c.bf16 %v417, %v417
        %v503 = vpack.c.bf16 %v420, %v420
        %v504 = vpack.c.bf16 %v423, %v423
        %v505 = vpack.c.bf16 %v426, %v426
        %v506 = vpack.c.bf16 %v429, %v429
        %v507 = vpack.c.bf16 %v432, %v432
        %v508 = vpack.c.bf16 %v435, %v435
        %v509 = vpack.c.bf16 %v438, %v438
        %v510 = vpack.c.bf16 %v441, %v441
        %v511 = vpack.c.bf16 %v444, %v444
        %v512 = vpack.c.bf16 %v447, %v447
        %v513 = vpack.c.bf16 %v450, %v450
        %v514 = vpack.c.bf16 %v453, %v453
        %v515 = vpack.c.bf16 %v456, %v456
        %v516 = vpack.c.bf16 %v459, %v459
        %v517 = vpack.c.bf16 %v462, %v462
        %v518 = vpack.c.bf16 %v465, %v465
        %v519 = vpack.c.bf16 %v468, %v468
        %v520 = vpack.c.bf16 %v471, %v471
        %v521 = vpack.c.bf16 %v474, %v474
        %v522 = vpack.c.bf16 %v477, %v477
        %v523 = vpack.c.bf16 %v480, %v480
        %v524 = vpack.c.bf16 %v483, %v483
        %v525 = vpack.c.bf16 %v486, %v486
        %v526 = vpack.c.bf16 %v489, %v489
        %v527 = vpack.c.bf16 %v492, %v492
        %v528 = vpack.c.bf16 %v495, %v495
        %529 = vst [vmem:[%s219] sm:$0xf] %v497
        %530 = vst [vmem:[%s219 + $0x4] sm:$0xf] %v498
        %531 = vst [vmem:[%s219 + $0x8] sm:$0xf] %v499
        %532 = vst [vmem:[%s219 + $0xc] sm:$0xf] %v500
        %533 = vst [vmem:[%s219 + $0x10] sm:$0xf] %v501
        %534 = vst [vmem:[%s219 + $0x14] sm:$0xf] %v502
        %535 = vst [vmem:[%s219 + $0x18] sm:$0xf] %v503
        %536 = vst [vmem:[%s219 + $0x1c] sm:$0xf] %v504
        %537 = vst [vmem:[%s219 + $0x20] sm:$0xf] %v505
        %538 = vst [vmem:[%s219 + $0x24] sm:$0xf] %v506
        %539 = vst [vmem:[%s219 + $0x28] sm:$0xf] %v507
        %540 = vst [vmem:[%s219 + $0x2c] sm:$0xf] %v508
        %541 = vst [vmem:[%s219 + $0x30] sm:$0xf] %v509
        %542 = vst [vmem:[%s219 + $0x34] sm:$0xf] %v510
        %543 = vst [vmem:[%s219 + $0x38] sm:$0xf] %v511
        %544 = vst [vmem:[%s219 + $0x3c] sm:$0xf] %v512
        %545 = vst [vmem:[%s219 + $0x40] sm:$0xf] %v513
        %546 = vst [vmem:[%s219 + $0x44] sm:$0xf] %v514
        %547 = vst [vmem:[%s219 + $0x48] sm:$0xf] %v515
        %548 = vst [vmem:[%s219 + $0x4c] sm:$0xf] %v516
        %549 = vst [vmem:[%s219 + $0x50] sm:$0xf] %v517
        %550 = vst [vmem:[%s219 + $0x54] sm:$0xf] %v518
        %551 = vst [vmem:[%s219 + $0x58] sm:$0xf] %v519
        %552 = vst [vmem:[%s219 + $0x5c] sm:$0xf] %v520
        %553 = vst [vmem:[%s219 + $0x60] sm:$0xf] %v521
        %554 = vst [vmem:[%s219 + $0x64] sm:$0xf] %v522
        %555 = vst [vmem:[%s219 + $0x68] sm:$0xf] %v523
        %556 = vst [vmem:[%s219 + $0x6c] sm:$0xf] %v524
        %557 = vst [vmem:[%s219 + $0x70] sm:$0xf] %v525
        %558 = vst [vmem:[%s219 + $0x74] sm:$0xf] %v526
        %559 = vst [vmem:[%s219 + $0x78] sm:$0xf] %v527
        %560 = vst [vmem:[%s219 + $0x7c] sm:$0xf] %v528
        %v561 = vld [vmem:[%s2] sm:$0x1]
        %v562 = vperm.slane %v561, 0
        %v563 = vmul.f32 %v402, %v562
        %v564 = vmul.f32 %v405, %v562
        %v565 = vmul.f32 %v408, %v562
        %v566 = vmul.f32 %v411, %v562
        %v567 = vmul.f32 %v414, %v562
        %v568 = vmul.f32 %v417, %v562
        %v569 = vmul.f32 %v420, %v562
        %v570 = vmul.f32 %v423, %v562
        %v571 = vmul.f32 %v426, %v562
        %v572 = vmul.f32 %v429, %v562
        %v573 = vmul.f32 %v432, %v562
        %v574 = vmul.f32 %v435, %v562
        %v575 = vmul.f32 %v438, %v562
        %v576 = vmul.f32 %v441, %v562
        %v577 = vmul.f32 %v444, %v562
        %v578 = vmul.f32 %v447, %v562
        %v579 = vmul.f32 %v450, %v562
        %v580 = vmul.f32 %v453, %v562
        %v581 = vmul.f32 %v456, %v562
        %v582 = vmul.f32 %v459, %v562
        %v583 = vmul.f32 %v462, %v562
        %v584 = vmul.f32 %v465, %v562
        %v585 = vmul.f32 %v468, %v562
        %v586 = vmul.f32 %v471, %v562
        %v587 = vmul.f32 %v474, %v562
        %v588 = vmul.f32 %v477, %v562
        %v589 = vmul.f32 %v480, %v562
        %v590 = vmul.f32 %v483, %v562
        %v591 = vmul.f32 %v486, %v562
        %v592 = vmul.f32 %v489, %v562
        %v593 = vmul.f32 %v492, %v562
        %v594 = vmul.f32 %v495, %v562
        %595 = vadd.xlane.f32.xlu0 %v563
        %v596 = vpop.xlane.xlu0 %595
        %597 = vadd.xlane.f32.xlu0 %v564
        %v598 = vpop.xlane.xlu0 %597
        %599 = vadd.xlane.f32.xlu0 %v565
        %v600 = vpop.xlane.xlu0 %599
        %601 = vadd.xlane.f32.xlu0 %v566
        %v602 = vpop.xlane.xlu0 %601
        %603 = vadd.xlane.f32.xlu0 %v567
        %v604 = vpop.xlane.xlu0 %603
        %605 = vadd.xlane.f32.xlu0 %v568
        %v606 = vpop.xlane.xlu0 %605
        %607 = vadd.xlane.f32.xlu0 %v569
        %v608 = vpop.xlane.xlu0 %607
        %609 = vadd.xlane.f32.xlu0 %v570
        %v610 = vpop.xlane.xlu0 %609
        %611 = vadd.xlane.f32.xlu0 %v571
        %v612 = vpop.xlane.xlu0 %611
        %613 = vadd.xlane.f32.xlu0 %v572
        %v614 = vpop.xlane.xlu0 %613
        %615 = vadd.xlane.f32.xlu0 %v573
        %v616 = vpop.xlane.xlu0 %615
        %617 = vadd.xlane.f32.xlu0 %v574
        %v618 = vpop.xlane.xlu0 %617
        %619 = vadd.xlane.f32.xlu0 %v575
        %v620 = vpop.xlane.xlu0 %619
        %621 = vadd.xlane.f32.xlu0 %v576
        %v622 = vpop.xlane.xlu0 %621
        %623 = vadd.xlane.f32.xlu0 %v577
        %v624 = vpop.xlane.xlu0 %623
        %625 = vadd.xlane.f32.xlu0 %v578
        %v626 = vpop.xlane.xlu0 %625
        %627 = vadd.xlane.f32.xlu0 %v579
        %v628 = vpop.xlane.xlu0 %627
        %629 = vadd.xlane.f32.xlu0 %v580
        %v630 = vpop.xlane.xlu0 %629
        %631 = vadd.xlane.f32.xlu0 %v581
        %v632 = vpop.xlane.xlu0 %631
        %633 = vadd.xlane.f32.xlu0 %v582
        %v634 = vpop.xlane.xlu0 %633
        %635 = vadd.xlane.f32.xlu0 %v583
        %v636 = vpop.xlane.xlu0 %635
        %637 = vadd.xlane.f32.xlu0 %v584
        %v638 = vpop.xlane.xlu0 %637
        %639 = vadd.xlane.f32.xlu0 %v585
        %v640 = vpop.xlane.xlu0 %639
        %641 = vadd.xlane.f32.xlu0 %v586
        %v642 = vpop.xlane.xlu0 %641
        %643 = vadd.xlane.f32.xlu0 %v587
        %v644 = vpop.xlane.xlu0 %643
        %645 = vadd.xlane.f32.xlu0 %v588
        %v646 = vpop.xlane.xlu0 %645
        %647 = vadd.xlane.f32.xlu0 %v589
        %v648 = vpop.xlane.xlu0 %647
        %649 = vadd.xlane.f32.xlu0 %v590
        %v650 = vpop.xlane.xlu0 %649
        %651 = vadd.xlane.f32.xlu0 %v591
        %v652 = vpop.xlane.xlu0 %651
        %653 = vadd.xlane.f32.xlu0 %v592
        %v654 = vpop.xlane.xlu0 %653
        %655 = vadd.xlane.f32.xlu0 %v593
        %v656 = vpop.xlane.xlu0 %655
        %657 = vadd.xlane.f32.xlu0 %v594
        %v658 = vpop.xlane.xlu0 %657
        %vm659 = vcmask 7168
        %660 = vst.msk [vmem:[%s245] sm:$0xff] %vm659, %v596
        %661 = vst.msk [vmem:[%s245 + $0x8] sm:$0xff] %vm659, %v598
        %662 = vst.msk [vmem:[%s245 + $0x10] sm:$0xff] %vm659, %v600
        %663 = vst.msk [vmem:[%s245 + $0x18] sm:$0xff] %vm659, %v602
        %664 = vst.msk [vmem:[%s245 + $0x20] sm:$0xff] %vm659, %v604
        %665 = vst.msk [vmem:[%s245 + $0x28] sm:$0xff] %vm659, %v606
        %666 = vst.msk [vmem:[%s245 + $0x30] sm:$0xff] %vm659, %v608
        %667 = vst.msk [vmem:[%s245 + $0x38] sm:$0xff] %vm659, %v610
        %668 = vst.msk [vmem:[%s245 + $0x40] sm:$0xff] %vm659, %v612
        %669 = vst.msk [vmem:[%s245 + $0x48] sm:$0xff] %vm659, %v614
        %670 = vst.msk [vmem:[%s245 + $0x50] sm:$0xff] %vm659, %v616
        %671 = vst.msk [vmem:[%s245 + $0x58] sm:$0xff] %vm659, %v618
        %672 = vst.msk [vmem:[%s245 + $0x60] sm:$0xff] %vm659, %v620
        %673 = vst.msk [vmem:[%s245 + $0x68] sm:$0xff] %vm659, %v622
        %674 = vst.msk [vmem:[%s245 + $0x70] sm:$0xff] %vm659, %v624
        %675 = vst.msk [vmem:[%s245 + $0x78] sm:$0xff] %vm659, %v626
        %676 = vst.msk [vmem:[%s245 + $0x80] sm:$0xff] %vm659, %v628
        %677 = vst.msk [vmem:[%s245 + $0x88] sm:$0xff] %vm659, %v630
        %678 = vst.msk [vmem:[%s245 + $0x90] sm:$0xff] %vm659, %v632
        %679 = vst.msk [vmem:[%s245 + $0x98] sm:$0xff] %vm659, %v634
        %680 = vst.msk [vmem:[%s245 + $0xa0] sm:$0xff] %vm659, %v636
        %681 = vst.msk [vmem:[%s245 + $0xa8] sm:$0xff] %vm659, %v638
        %682 = vst.msk [vmem:[%s245 + $0xb0] sm:$0xff] %vm659, %v640
        %683 = vst.msk [vmem:[%s245 + $0xb8] sm:$0xff] %vm659, %v642
        %684 = vst.msk [vmem:[%s245 + $0xc0] sm:$0xff] %vm659, %v644
        %685 = vst.msk [vmem:[%s245 + $0xc8] sm:$0xff] %vm659, %v646
        %686 = vst.msk [vmem:[%s245 + $0xd0] sm:$0xff] %vm659, %v648
        %687 = vst.msk [vmem:[%s245 + $0xd8] sm:$0xff] %vm659, %v650
        %688 = vst.msk [vmem:[%s245 + $0xe0] sm:$0xff] %vm659, %v652
        %689 = vst.msk [vmem:[%s245 + $0xe8] sm:$0xff] %vm659, %v654
        %690 = vst.msk [vmem:[%s245 + $0xf0] sm:$0xff] %vm659, %v656
        %691 = vst.msk [vmem:[%s245 + $0xf8] sm:$0xff] %vm659, %v658
        %v692 = vld [vmem:[%s2 + $0x1] sm:$0x1]
        %v693 = vperm.slane %v692, 0
        %v694 = vmul.f32 %v402, %v693
        %v695 = vmul.f32 %v405, %v693
        %v696 = vmul.f32 %v408, %v693
        %v697 = vmul.f32 %v411, %v693
        %v698 = vmul.f32 %v414, %v693
        %v699 = vmul.f32 %v417, %v693
        %v700 = vmul.f32 %v420, %v693
        %v701 = vmul.f32 %v423, %v693
        %v702 = vmul.f32 %v426, %v693
        %v703 = vmul.f32 %v429, %v693
        %v704 = vmul.f32 %v432, %v693
        %v705 = vmul.f32 %v435, %v693
        %v706 = vmul.f32 %v438, %v693
        %v707 = vmul.f32 %v441, %v693
        %v708 = vmul.f32 %v444, %v693
        %v709 = vmul.f32 %v447, %v693
        %v710 = vmul.f32 %v450, %v693
        %v711 = vmul.f32 %v453, %v693
        %v712 = vmul.f32 %v456, %v693
        %v713 = vmul.f32 %v459, %v693
        %v714 = vmul.f32 %v462, %v693
        %v715 = vmul.f32 %v465, %v693
        %v716 = vmul.f32 %v468, %v693
        %v717 = vmul.f32 %v471, %v693
        %v718 = vmul.f32 %v474, %v693
        %v719 = vmul.f32 %v477, %v693
        %v720 = vmul.f32 %v480, %v693
        %v721 = vmul.f32 %v483, %v693
        %v722 = vmul.f32 %v486, %v693
        %v723 = vmul.f32 %v489, %v693
        %v724 = vmul.f32 %v492, %v693
        %v725 = vmul.f32 %v495, %v693
        %726 = vadd.xlane.f32.xlu0 %v694
        %v727 = vpop.xlane.xlu0 %726
        %728 = vadd.xlane.f32.xlu0 %v695
        %v729 = vpop.xlane.xlu0 %728
        %730 = vadd.xlane.f32.xlu0 %v696
        %v731 = vpop.xlane.xlu0 %730
        %732 = vadd.xlane.f32.xlu0 %v697
        %v733 = vpop.xlane.xlu0 %732
        %734 = vadd.xlane.f32.xlu0 %v698
        %v735 = vpop.xlane.xlu0 %734
        %736 = vadd.xlane.f32.xlu0 %v699
        %v737 = vpop.xlane.xlu0 %736
        %738 = vadd.xlane.f32.xlu0 %v700
        %v739 = vpop.xlane.xlu0 %738
        %740 = vadd.xlane.f32.xlu0 %v701
        %v741 = vpop.xlane.xlu0 %740
        %742 = vadd.xlane.f32.xlu0 %v702
        %v743 = vpop.xlane.xlu0 %742
        %744 = vadd.xlane.f32.xlu0 %v703
        %v745 = vpop.xlane.xlu0 %744
        %746 = vadd.xlane.f32.xlu0 %v704
        %v747 = vpop.xlane.xlu0 %746
        %748 = vadd.xlane.f32.xlu0 %v705
        %v749 = vpop.xlane.xlu0 %748
        %750 = vadd.xlane.f32.xlu0 %v706
        %v751 = vpop.xlane.xlu0 %750
        %752 = vadd.xlane.f32.xlu0 %v707
        %v753 = vpop.xlane.xlu0 %752
        %754 = vadd.xlane.f32.xlu0 %v708
        %v755 = vpop.xlane.xlu0 %754
        %756 = vadd.xlane.f32.xlu0 %v709
        %v757 = vpop.xlane.xlu0 %756
        %758 = vadd.xlane.f32.xlu0 %v710
        %v759 = vpop.xlane.xlu0 %758
        %760 = vadd.xlane.f32.xlu0 %v711
        %v761 = vpop.xlane.xlu0 %760
        %762 = vadd.xlane.f32.xlu0 %v712
        %v763 = vpop.xlane.xlu0 %762
        %764 = vadd.xlane.f32.xlu0 %v713
        %v765 = vpop.xlane.xlu0 %764
        %766 = vadd.xlane.f32.xlu0 %v714
        %v767 = vpop.xlane.xlu0 %766
        %768 = vadd.xlane.f32.xlu0 %v715
        %v769 = vpop.xlane.xlu0 %768
        %770 = vadd.xlane.f32.xlu0 %v716
        %v771 = vpop.xlane.xlu0 %770
        %772 = vadd.xlane.f32.xlu0 %v717
        %v773 = vpop.xlane.xlu0 %772
        %774 = vadd.xlane.f32.xlu0 %v718
        %v775 = vpop.xlane.xlu0 %774
        %776 = vadd.xlane.f32.xlu0 %v719
        %v777 = vpop.xlane.xlu0 %776
        %778 = vadd.xlane.f32.xlu0 %v720
        %v779 = vpop.xlane.xlu0 %778
        %780 = vadd.xlane.f32.xlu0 %v721
        %v781 = vpop.xlane.xlu0 %780
        %782 = vadd.xlane.f32.xlu0 %v722
        %v783 = vpop.xlane.xlu0 %782
        %784 = vadd.xlane.f32.xlu0 %v723
        %v785 = vpop.xlane.xlu0 %784
        %786 = vadd.xlane.f32.xlu0 %v724
        %v787 = vpop.xlane.xlu0 %786
        %788 = vadd.xlane.f32.xlu0 %v725
        %v789 = vpop.xlane.xlu0 %788
        %790 = vst.msk [vmem:[%s251] sm:$0xff] %vm659, %v727
        %791 = vst.msk [vmem:[%s251 + $0x8] sm:$0xff] %vm659, %v729
        %792 = vst.msk [vmem:[%s251 + $0x10] sm:$0xff] %vm659, %v731
        %793 = vst.msk [vmem:[%s251 + $0x18] sm:$0xff] %vm659, %v733
        %794 = vst.msk [vmem:[%s251 + $0x20] sm:$0xff] %vm659, %v735
        %795 = vst.msk [vmem:[%s251 + $0x28] sm:$0xff] %vm659, %v737
        %796 = vst.msk [vmem:[%s251 + $0x30] sm:$0xff] %vm659, %v739
        %797 = vst.msk [vmem:[%s251 + $0x38] sm:$0xff] %vm659, %v741
        %798 = vst.msk [vmem:[%s251 + $0x40] sm:$0xff] %vm659, %v743
        %799 = vst.msk [vmem:[%s251 + $0x48] sm:$0xff] %vm659, %v745
        %800 = vst.msk [vmem:[%s251 + $0x50] sm:$0xff] %vm659, %v747
        %801 = vst.msk [vmem:[%s251 + $0x58] sm:$0xff] %vm659, %v749
        %802 = vst.msk [vmem:[%s251 + $0x60] sm:$0xff] %vm659, %v751
        %803 = vst.msk [vmem:[%s251 + $0x68] sm:$0xff] %vm659, %v753
        %804 = vst.msk [vmem:[%s251 + $0x70] sm:$0xff] %vm659, %v755
        %805 = vst.msk [vmem:[%s251 + $0x78] sm:$0xff] %vm659, %v757
        %806 = vst.msk [vmem:[%s251 + $0x80] sm:$0xff] %vm659, %v759
        %807 = vst.msk [vmem:[%s251 + $0x88] sm:$0xff] %vm659, %v761
        %808 = vst.msk [vmem:[%s251 + $0x90] sm:$0xff] %vm659, %v763
        %809 = vst.msk [vmem:[%s251 + $0x98] sm:$0xff] %vm659, %v765
        %810 = vst.msk [vmem:[%s251 + $0xa0] sm:$0xff] %vm659, %v767
        %811 = vst.msk [vmem:[%s251 + $0xa8] sm:$0xff] %vm659, %v769
        %812 = vst.msk [vmem:[%s251 + $0xb0] sm:$0xff] %vm659, %v771
        %813 = vst.msk [vmem:[%s251 + $0xb8] sm:$0xff] %vm659, %v773
        %814 = vst.msk [vmem:[%s251 + $0xc0] sm:$0xff] %vm659, %v775
        %815 = vst.msk [vmem:[%s251 + $0xc8] sm:$0xff] %vm659, %v777
        %816 = vst.msk [vmem:[%s251 + $0xd0] sm:$0xff] %vm659, %v779
        %817 = vst.msk [vmem:[%s251 + $0xd8] sm:$0xff] %vm659, %v781
        %818 = vst.msk [vmem:[%s251 + $0xe0] sm:$0xff] %vm659, %v783
        %819 = vst.msk [vmem:[%s251 + $0xe8] sm:$0xff] %vm659, %v785
        %820 = vst.msk [vmem:[%s251 + $0xf0] sm:$0xff] %vm659, %v787
        %821 = vst.msk [vmem:[%s251 + $0xf8] sm:$0xff] %vm659, %v789
        %s822 = sand.u32 %s96, 1
        %s823 = scalar_lea.sflag [#allocation3], %s822
        %s824 = sand.u32 %s96, 1
        %s825 = smul.addr %s824, 128
        %s826 = scalar_lea.vmem [#allocation2], %s825
        %s827 = smul.u32 32, %s20
        %p828 = scmp.lt.s32.totalorder %s827, 63
        %s829 = scalar_select %p828, %s827, 63
        %s830 = smul.addr %s829, 8
        %s831 = scalar_lea.vmem %s4, %s830
        %s832 = smul.u32 32, %s20
        %p833 = scmp.lt.s32.totalorder %s832, 63
        %s834 = scalar_select %p833, %s832, 63
        %s835 = smul.addr %s834, 8
        %s836 = scalar_lea.vmem %s5, %s835
        // Predicated region
        $region33: #{tpu_custom_call.1} parent=31 // pred_check
          %p837 = pneg %p106
        $region34: #{tpu_custom_call.1} parent=31 // pred_check_branch
          %839 = sbr.rel (%p837) target = $region36
        $region35: #{tpu_custom_call.1} parent=31 // pred_region
          %s840 = smul.u32 32, %s20
          %842 = vsyncadd %s823, 0
          %s843 = smul.addr %s840, 4
          %s844 = scalar_lea.hbm %s3, %s843
          %s845 = sshll.u32 %s826, 4
          %s846 = int_to_ptr.vmem [resolvable:$true] %s845
          %s847 = sshll.u32 %s844, 4
          %s848 = int_to_ptr.hbm [resolvable:$true] %s847
          %853 = dma.vmem_to_hbm [thread:$0]  %s846, 2048, %s848, %s823, 64, 64, 4
        $region36: #{tpu_custom_call.1} parent=31 // pred_fallthru
          _
        // Predicated region
        $region37: #{tpu_custom_call.1} parent=31 // pred_check
          %p854 = pneg %p132
        $region38: #{tpu_custom_call.1} parent=31 // pred_check_branch
          %856 = sbr.rel (%p854) target = $region40
        $region39: #{tpu_custom_call.1} parent=31 // pred_region
          %s857 = smul.u32 32, %s20
        $region40: #{tpu_custom_call.1} parent=31 // pred_fallthru
          _
        // Predicated region
        $region41: #{tpu_custom_call.1} parent=31 // pred_check
          %p858 = pneg %p158
        $region42: #{tpu_custom_call.1} parent=31 // pred_check_branch
          %860 = sbr.rel (%p858) target = $region44
        $region43: #{tpu_custom_call.1} parent=31 // pred_region
          %s861 = smul.u32 32, %s20
        $region44: #{tpu_custom_call.1} parent=31 // pred_fallthru
          _
      $region32: #{tpu_custom_call.1} parent=5 // pred_fallthru
        _
      %p862 = scmp.le.s32.totalorder 2, %s15
      // Predicated region
      $region45: #{tpu_custom_call.1} parent=5 // pred_check
        %p863 = pneg %p862
      $region46: #{tpu_custom_call.1} parent=5 // pred_check_branch
        %865 = sbr.rel (%p863) target = $region48
      $region47: #{tpu_custom_call.1} parent=5 // pred_region
        %s866 = ssub.s32 %s15, 2
        // Predicated region
        $region49: #{tpu_custom_call.1} parent=47 // pred_check
          %p867 = pneg %p112
        $region50: #{tpu_custom_call.1} parent=47 // pred_check_branch
          %869 = sbr.rel (%p867) target = $region52
        $region51: #{tpu_custom_call.1} parent=47 // pred_region
          %s870 = sand.u32 %s97, 1
          %s871 = scalar_lea.sflag [#allocation3], %s870
          %s872 = sand.u32 %s97, 1
          %s873 = smul.addr %s872, 128
          %s874 = scalar_lea.vmem [#allocation2], %s873
          %876 = dma.done %s871, 2048
        $region52: #{tpu_custom_call.1} parent=47 // pred_fallthru
          _
        // Predicated region
        $region53: #{tpu_custom_call.1} parent=47 // pred_check
          %p877 = pneg %p138
        $region54: #{tpu_custom_call.1} parent=47 // pred_check_branch
          %879 = sbr.rel (%p877) target = $region56
        $region55: #{tpu_custom_call.1} parent=47 // pred_region
          %s880 = smul.u32 32, %s21
          %p881 = scmp.lt.s32.totalorder %s880, 63
          %s882 = scalar_select %p881, %s880, 63
          %s883 = smul.addr %s882, 8
          %s884 = scalar_lea.vmem %s4, %s883
        $region56: #{tpu_custom_call.1} parent=47 // pred_fallthru
          _
        // Predicated region
        $region57: #{tpu_custom_call.1} parent=47 // pred_check
          %p885 = pneg %p164
        $region58: #{tpu_custom_call.1} parent=47 // pred_check_branch
          %887 = sbr.rel (%p885) target = $region60
        $region59: #{tpu_custom_call.1} parent=47 // pred_region
          %s888 = smul.u32 32, %s21
          %p889 = scmp.lt.s32.totalorder %s888, 63
          %s890 = scalar_select %p889, %s888, 63
          %s891 = smul.addr %s890, 8
          %s892 = scalar_lea.vmem %s5, %s891
        $region60: #{tpu_custom_call.1} parent=47 // pred_fallthru
          _
      $region48: #{tpu_custom_call.1} parent=5 // pred_fallthru
        _
    $region6: #{tpu_custom_call.1} parent=1 // loop_footer
      %s19 = sadd.s32 1, %s15
    $region7: #{tpu_custom_call.1} parent=1 // loop_footer_branch
      %14 = sbr.rel target = $region3
    $region8: #{tpu_custom_call.1} parent=1 // loop_exit
      _
    %893 = vsyncpa [#allocation3], 1
    %s894 = scalar_lea.sflag [#allocation3], 1
    %895 = vsyncpa %s894, 1

</llo_original>
